<compile_context>
chip_gen: v5e
topology: v5e:2x2
jax: 0.10.0
libtpu: 0.0.40
codegen_flags: <defaults>
</compile_context>

<pallas_src>
import functools

import jax
import jax.numpy as jnp
from jax.experimental import pallas as pl
from jax.experimental.pallas import tpu as pltpu

_LANE = 128
_SUB = 8
_EPS = 1e-6


def _cdiv(a, b):
    return -(-a // b)


def _round_up(a, b):
    return _cdiv(a, b) * b


def _round_down(a, b):
    return (a // b) * b


# --------------------------------------------------------------------------
# Kernels
# --------------------------------------------------------------------------
def _normalize_kernel(x_ref, o_ref):
    """Single-pass path: whole batch resident, x_ref/o_ref are (N, ts, 128)."""
    x = x_ref[...].astype(jnp.float32)
    n = x.shape[0]
    mean = jnp.mean(x, axis=0, keepdims=True)                   # (1, ts, 128)
    d = x - mean                                                # (N, ts, 128)
    # torch.std default is unbiased (ddof = 1); N == 1 divides by 1 (see top).
    denom = jnp.float32(max(n - 1, 1))
    var = jnp.sum(d * d, axis=0, keepdims=True) / denom         # (1, ts, 128)
    # One reciprocal per feature column + one VPU multiply for all N rows.
    inv = pl.reciprocal(jnp.sqrt(var) + jnp.float32(_EPS), approx=False)
    o_ref[...] = (d * inv).astype(o_ref.dtype)


def _stats_kernel(x_ref, mean_ref, inv_ref, sum_sc, sq_sc, shift_sc, *, n_rows):
    """Large-N path, pass 1: per-column batch stats accumulated over batch tiles.

    grid = (feature_tiles, batch_tiles); the batch axis is the inner
    "arbitrary" axis and mean/inv stay resident across it.  Uses the shifted
    single-pass variance  Sum((x-K)^2) - n*mean(x-K)^2  with K = x[0] per
    column, which avoids the catastrophic cancellation of the naive
    E[x^2] - E[x]^2 form.
    """
    i = pl.program_id(1)
    nt = x_ref.shape[0]
    x = x_ref[...].astype(jnp.float32)                          # (nt, ts, 128)

    @pl.when(i == 0)
    def _():
        shift_sc[...] = x[0]                                    # batch row 0 is always valid
        sum_sc[...] = jnp.zeros_like(sum_sc)
        sq_sc[...] = jnp.zeros_like(sq_sc)

    d = x - shift_sc[...]
    if n_rows % nt:
        # Ragged last batch tile: zero the contribution of out-of-range rows.
        row = jax.lax.broadcasted_iota(jnp.int32, (nt, 1, 1), 0) + i * nt
        d = jnp.where(row < n_rows, d, 0.0)
    sum_sc[...] += jnp.sum(d, axis=0)
    sq_sc[...] += jnp.sum(d * d, axis=0)

    @pl.when(i == pl.num_programs(1) - 1)
    def _():
        n = jnp.float32(n_rows)
        denom = jnp.float32(max(n_rows - 1, 1))
        mean_d = sum_sc[...] / n
        var = jnp.maximum(sq_sc[...] - n * mean_d * mean_d, 0.0) / denom
        mean_ref[...] = shift_sc[...] + mean_d
        inv_ref[...] = pl.reciprocal(jnp.sqrt(var) + jnp.float32(_EPS), approx=False)


def _apply_kernel(x_ref, mean_ref, inv_ref, o_ref):
    """Large-N path, pass 2: y = (x - mean) * inv, fully parallel."""
    x = x_ref[...].astype(jnp.float32)                          # (nt, ts, 128)
    o_ref[...] = ((x - mean_ref[...]) * inv_ref[...]).astype(o_ref.dtype)


# --------------------------------------------------------------------------
# Tiling / VMEM planning
# --------------------------------------------------------------------------
def _vmem_plan():
    """(scoped_vmem_limit_bytes, kernel_working_set_budget), generation aware."""
    try:
        cap = int(pltpu.get_tpu_info().vmem_capacity_bytes)
    except Exception:  # conservative fallback (assume v7x: 64 MiB / TC)
        cap = 64 * 1024 * 1024
    scoped = min((cap * 3) // 4, 96 * 1024 * 1024)   # v7x: 48 MiB, v5e/v6e: 96 MiB
    budget = max(scoped - 8 * 1024 * 1024, 8 * 1024 * 1024)  # headroom for compiler scratch
    return scoped, budget


def _plan_tiles(S, N, elem_bytes, budget):
    """Choose tiles.  Returns ("single", ts, None) or ("two_pass", ts, nt)."""
    s_pad = _round_up(S, _SUB)

    # ---- single-kernel path: the whole batch of one feature tile in VMEM ----
    # per 128-lane column: 2 pipeline buffers x (in + out) + ~2 f32 temporaries
    per_col = 4 * N * _LANE * elem_bytes + 2 * N * _LANE * 4
    max_ts = _round_down(budget // per_col, _SUB)
    if max_ts >= _SUB:
        # >= ~2 MiB of in+out HBM traffic per grid step (amortize ~0.35us/step)
        min_ts = max(_SUB, _round_down((2 << 20) // (2 * N * _LANE * elem_bytes), _SUB))
        # ~16 grid steps => >= 8 per v7x TensorCore with an even split
        ts = _round_up(_cdiv(S, 16), _SUB)
        ts = max(ts, min_ts)
        ts = min(ts, max_ts, s_pad)
        gl = _cdiv(S, ts)
        if gl > 1 and gl % 2:
            # prefer an even step count so both v7x cores get equal work
            ts2 = _round_up(_cdiv(S, gl + 1), _SUB)
            if (_SUB <= ts2 <= max_ts and _cdiv(S, ts2) % 2 == 0
                    and 2 * N * ts2 * _LANE * elem_bytes >= (1 << 20)):
                ts = ts2
        return "single", ts, None

    # ---- two-pass path: batch too large for a resident (N, 8, 128) column ----
    ts = min(s_pad, 512)
    # apply kernel footprint per batch row: 2 in + 2 out buffers + ~2 f32 temps
    per_row = ts * _LANE * (4 * elem_bytes + 2 * 4)
    nt = max(_SUB, _round_down(budget // per_row, _SUB))
    nt = min(nt, _round_up(N, _SUB))
    return "two_pass", ts, nt


# --------------------------------------------------------------------------
# Wrapper
# --------------------------------------------------------------------------
def normalize(x: jax.Array) -> jax.Array:
    """(x - x.mean(0)) / (x.std(0, ddof=1) + 1e-6) over the batch dim of NCHW x."""
    N, C, H, W = x.shape
    F = C * H * W
    elem_bytes = jnp.dtype(x.dtype).itemsize

    scoped, budget = _vmem_plan()

    # Re-lay features as (S, 128).  Only the lane dim needs padding to 128 for
    # the reshape; ragged feature blocks along S are masked by Pallas, so for
    # the common F % 128 == 0 case there is no pad / slice HBM pass at all and
    # both reshapes are free (no data movement).
    S = _cdiv(F, _LANE)
    F_pad = S * _LANE
    x2 = x.reshape(N, F)
    if F_pad != F:
        x2 = jnp.pad(x2, ((0, 0), (0, F_pad - F)))
    x3 = x2.reshape(N, S, _LANE)

    mode, ts, nt = _plan_tiles(S, N, elem_bytes, budget)

    if mode == "single":
        out3 = pl.pallas_call(
            _normalize_kernel,
            out_shape=jax.ShapeDtypeStruct((N, S, _LANE), x.dtype),
            grid_spec=pltpu.PrefetchScalarGridSpec(
                num_scalar_prefetch=0,
                grid=(_cdiv(S, ts),),
                in_specs=[pl.BlockSpec((N, ts, _LANE), lambda j: (0, j, 0))],
                out_specs=pl.BlockSpec((N, ts, _LANE), lambda j: (0, j, 0)),
            ),
            compiler_params=pltpu.CompilerParams(
                dimension_semantics=("parallel",),
                vmem_limit_bytes=scoped,
            ),
        )(x3)
    else:
        grid = (_cdiv(S, ts), _cdiv(N, nt))
        mean, inv = pl.pallas_call(
            functools.partial(_stats_kernel, n_rows=N),
            out_shape=(jax.ShapeDtypeStruct((S, _LANE), jnp.float32),
                       jax.ShapeDtypeStruct((S, _LANE), jnp.float32)),
            grid_spec=pltpu.PrefetchScalarGridSpec(
                num_scalar_prefetch=0,
                grid=grid,
                in_specs=[pl.BlockSpec((nt, ts, _LANE), lambda j, i: (i, j, 0))],
                out_specs=[pl.BlockSpec((ts, _LANE), lambda j, i: (j, 0)),
                           pl.BlockSpec((ts, _LANE), lambda j, i: (j, 0))],
                scratch_shapes=[pltpu.VMEM((ts, _LANE), jnp.float32)] * 3,
            ),
            compiler_params=pltpu.CompilerParams(
                dimension_semantics=("parallel", "arbitrary"),
                vmem_limit_bytes=scoped,
            ),
        )(x3)
        out3 = pl.pallas_call(
            _apply_kernel,
            out_shape=jax.ShapeDtypeStruct((N, S, _LANE), x.dtype),
            grid_spec=pltpu.PrefetchScalarGridSpec(
                num_scalar_prefetch=0,
                grid=grid,
                in_specs=[pl.BlockSpec((nt, ts, _LANE), lambda j, i: (i, j, 0)),
                          pl.BlockSpec((ts, _LANE), lambda j, i: (j, 0)),
                          pl.BlockSpec((ts, _LANE), lambda j, i: (j, 0))],
                out_specs=pl.BlockSpec((nt, ts, _LANE), lambda j, i: (i, j, 0)),
            ),
            compiler_params=pltpu.CompilerParams(
                dimension_semantics=("parallel", "parallel"),
                vmem_limit_bytes=scoped,
            ),
        )(x3, mean, inv)

    out2 = out3.reshape(N, F_pad)
    if F_pad != F:
        out2 = out2[:, :F]
    return out2.reshape(N, C, H, W)


def _reference(x: jax.Array) -> jax.Array:
    mean = jnp.mean(x, axis=0, keepdims=True)
    std = jnp.std(x, axis=0, keepdims=True, ddof=1)
    return (x - mean) / (std + _EPS)


if __name__ == "__main__":
    key = jax.random.PRNGKey(0)
    x = jax.random.normal(key, (2, 4, 16, 16), dtype=jnp.float32)

    y = normalize(x)
    jax.block_until_ready(y)

    y_ref = _reference(x)
    assert y.shape == x.shape and y.dtype == x.dtype
    assert jnp.allclose(y, y_ref, atol=1e-4, rtol=1e-4), "mismatch vs reference"

    print("KERNEL_OK")
</pallas_src>

<mosaic_0001>
module attributes {stable_mosaic.version = 11 : i64} {
  func.func @_normalize_kernel(%arg0: i32, %arg1: memref<2x8x128xf32, #tpu.memory_space<vmem>>, %arg2: memref<2x8x128xf32, #tpu.memory_space<vmem>>) attributes {dimension_semantics = [#tpu.dimension_semantics<parallel>], iteration_bounds = array<i64: 1>, scalar_prefetch = 0 : i64, scratch_operands = 0 : i64, tpu.core_type = #tpu.core_type<tc>, window_params = [{transform_indices = @transform_0, window_bounds = array<i64: 2, 8, 128>}, {transform_indices = @transform_1, window_bounds = array<i64: 2, 8, 128>}]} {
    %c0 = arith.constant 0 : index
    %c0_0 = arith.constant 0 : index
    %c0_1 = arith.constant 0 : index
    %0 = vector.load %arg1[%c0, %c0_0, %c0_1] : memref<2x8x128xf32, #tpu.memory_space<vmem>>, vector<2x8x128xf32>
    %cst = arith.constant dense<0.000000e+00> : vector<8x128xf32>
    %1 = vector.multi_reduction <add>, %0, %cst [0] : vector<2x8x128xf32> to vector<8x128xf32>
    %2 = vector.shape_cast %1 : vector<8x128xf32> to vector<1x8x128xf32>
    %cst_2 = arith.constant 2.000000e+00 : f32
    %3 = vector.broadcast %cst_2 : f32 to vector<1x8x128xf32>
    %4 = arith.divf %2, %3 : vector<1x8x128xf32>
    %5 = vector.broadcast %4 : vector<1x8x128xf32> to vector<2x8x128xf32>
    %6 = arith.subf %0, %5 : vector<2x8x128xf32>
    %7 = arith.mulf %6, %6 : vector<2x8x128xf32>
    %cst_3 = arith.constant dense<0.000000e+00> : vector<8x128xf32>
    %8 = vector.multi_reduction <add>, %7, %cst_3 [0] : vector<2x8x128xf32> to vector<8x128xf32>
    %9 = vector.shape_cast %8 : vector<8x128xf32> to vector<1x8x128xf32>
    %cst_4 = arith.constant 1.000000e+00 : f32
    %10 = vector.broadcast %cst_4 : f32 to vector<1x8x128xf32>
    %11 = arith.divf %9, %10 : vector<1x8x128xf32>
    %12 = math.sqrt %11 : vector<1x8x128xf32>
    %cst_5 = arith.constant 9.99999997E-7 : f32
    %13 = vector.broadcast %cst_5 : f32 to vector<1x8x128xf32>
    %14 = arith.addf %12, %13 : vector<1x8x128xf32>
    %15 = tpu.reciprocal %14 : vector<1x8x128xf32> -> vector<1x8x128xf32>
    %16 = vector.broadcast %15 : vector<1x8x128xf32> to vector<2x8x128xf32>
    %17 = arith.mulf %6, %16 : vector<2x8x128xf32>
    %c0_6 = arith.constant 0 : index
    %c0_7 = arith.constant 0 : index
    %c0_8 = arith.constant 0 : index
    %18 = vector.load %arg2[%c0_6, %c0_7, %c0_8] : memref<2x8x128xf32, #tpu.memory_space<vmem>>, vector<2x8x128xf32>
    tpu.vector_store %arg2[%c0_6, %c0_7, %c0_8], %17 {strides = array<i32>} : memref<2x8x128xf32, #tpu.memory_space<vmem>>, vector<2x8x128xf32>,
    return
  }
  func.func @transform_0(%arg0: i32) -> (i32, i32, i32) {
    %c0_i32 = arith.constant 0 : i32
    %c0_i32_0 = arith.constant 0 : i32
    %c0_i32_1 = arith.constant 0 : i32
    return %c0_i32, %arg0, %c0_i32_0 : i32, i32, i32
  }
  func.func @transform_1(%arg0: i32) -> (i32, i32, i32) {
    %c0_i32 = arith.constant 0 : i32
    %c0_i32_0 = arith.constant 0 : i32
    %c0_i32_1 = arith.constant 0 : i32
    return %c0_i32, %arg0, %c0_i32_0 : i32, i32, i32
  }
}

</mosaic_0001>

<llo_original>
// kernel: tpu_custom_call.1
$region0: #{tpu_custom_call.1}
  #allocation0 [shape = 'u32[]', space=smem, size = 0x4, offset = 0x4, fixed_abs, tag = 'smem constant byte address 0x4 - core index']
  #allocation1 [shape = 'u32[72,128]{1,0:T(1,128)}', space=vmem, size = 0x9000, scoped, tag = 'internal scratch']
  %s0 = inlined_call_operand.hbm [shape: f32[2,8,128], index: 0, kind: input, shape index: {}]
  %s1 = inlined_call_operand.hbm [shape: f32[2,8,128], index: 1, kind: output, shape index: {}]
  %s2 = sld [smem:[#allocation0]]
  $region18: #{tpu_custom_call.1} parent=0
    _
  %s4 = ssub.s32 1, %s2
  %s5 = scalar_select 0, %s4, %s2
  $region1: #{tpu_custom_call.1} parent=0
    #allocation2 [shape = 'u8[8192]{0}', space=vmem, size = 0x2000, scoped, tag = 'input window, operand 0, single buffered']
    #allocation3 [shape = 's32[1]{0}', space=sflag, size = 0x4, scoped, tag = 'scoped memory for tpu_custom_call.1']
    #allocation4 [shape = 's32[1]{0}', space=sflag, size = 0x4, scoped, tag = 'scoped memory for tpu_custom_call.1']
    #allocation5 [shape = 'u8[8192]{0}', space=vmem, size = 0x2000, scoped, tag = 'output window, operand 0, single buffered']
    %6 = vsyncpa [#allocation3], 0
    %7 = vsyncpa [#allocation4], 0
    // Predicated region
    $region2: #{tpu_custom_call.1} parent=1 // pred_check
      _
    $region3: #{tpu_custom_call.1} parent=1 // pred_check_branch
      %9 = sbr.rel (0) target = $region5
    $region4: #{tpu_custom_call.1} parent=1 // pred_region
      %11 = vsyncadd [#allocation3], 0
      %s12 = sshll.u32 %s0, 4
      %s13 = int_to_ptr.hbm [resolvable:$true] %s12
      %s14 = sshll.u32 [#allocation2], 4
      %s15 = int_to_ptr.vmem [resolvable:$true] %s14
      %20 = dma.hbm_to_vmem [thread:$0]  %s13, 256, %s15, [#allocation3], 128, 128, 8
    $region5: #{tpu_custom_call.1} parent=1 // pred_fallthru
      _
    // Predicated region
    $region6: #{tpu_custom_call.1} parent=1 // pred_check
      _
    $region7: #{tpu_custom_call.1} parent=1 // pred_check_branch
      %22 = sbr.rel (0) target = $region9
    $region8: #{tpu_custom_call.1} parent=1 // pred_region
      %24 = dma.done [#allocation3], 256
    $region9: #{tpu_custom_call.1} parent=1 // pred_fallthru
      _
    %v25 = vld [vmem:[#allocation2] sm:$0xff]
    %v26 = vld [vmem:[#allocation2 + $0x8] sm:$0xff]
    %v27 = vadd.f32 %v25, %v26
    %v28 = vrcp.pop 2.0
    %v29 = vmul.f32 2.0, %v28
    %v30 = vsub.f32 1.0, %v29
    %v31 = vmul.f32 %v28, %v30
    %v32 = vadd.f32 %v28, %v31
    %vm33 = vweird.f32 %v28
    %v34 = vsel %vm33, %v28, %v32
    %v35 = vmul.f32 %v27, %v34
    %v36 = vsub.f32 %v25, %v35
    %v37 = vsub.f32 %v26, %v35
    %v38 = vmul.f32 %v36, %v36
    %v39 = vmul.f32 %v37, %v37
    %v40 = vadd.f32 %v38, %v39
    %v41 = vrsqrt.pop %v40
    %v42 = vmul.f32 %v41, %v40
    %v43 = vmul.f32 %v42, %v41
    %v44 = vmul.f32 0.5, %v43
    %v45 = vsub.f32 1.5, %v44
    %v46 = vmul.f32 %v41, %v45
    %v47 = vmul.f32 %v40, %v46
    %vm48 = vcmp.eq.f32.partialorder %v40, inf
    %v49 = vsel %vm48, %v40, %v47
    %vm50 = vcmp.eq.f32.partialorder %v40, 0.0
    %v51 = vand.u32 %v40, 2147483648
    %v52 = vsel %vm50, %v51, %v49
    %v53 = vadd.f32 %v52, 1e-06
    %v54 = vrcp.pop %v53
    %v55 = vmul.f32 %v53, %v54
    %v56 = vsub.f32 1.0, %v55
    %v57 = vmul.f32 %v54, %v56
    %v58 = vadd.f32 %v54, %v57
    %vm59 = vweird.f32 %v53
    %vm60 = vweird.f32 %v54
    %vm61 = vmor %vm59, %vm60
    %v62 = vsel %vm61, %v54, %v58
    %v63 = vand.u32 2147483647, %v53
    %vm64 = vcmp.eq.f32.partialorder %v63, 8.507059e+37
    %v65 = vand.u32 %v53, 2147483648
    %v66 = vor.u32 1.1754944e-38, %v65
    %v67 = vsel %vm64, %v66, %v62
    %v68 = vmul.f32 %v36, %v67
    %v69 = vmul.f32 %v37, %v67
    %70 = vst [vmem:[#allocation5] sm:$0xff] %v68
    %71 = vst [vmem:[#allocation5 + $0x8] sm:$0xff] %v69
    // Predicated region
    $region10: #{tpu_custom_call.1} parent=1 // pred_check
      _
    $region11: #{tpu_custom_call.1} parent=1 // pred_check_branch
      %73 = sbr.rel (0) target = $region13
    $region12: #{tpu_custom_call.1} parent=1 // pred_region
      %75 = vsyncadd [#allocation4], 0
      %s76 = sshll.u32 [#allocation5], 4
      %s77 = int_to_ptr.vmem [resolvable:$true] %s76
      %s78 = sshll.u32 %s1, 4
      %s79 = int_to_ptr.hbm [resolvable:$true] %s78
      %84 = dma.vmem_to_hbm [thread:$0]  %s77, 256, %s79, [#allocation4], 128, 128, 8
    $region13: #{tpu_custom_call.1} parent=1 // pred_fallthru
      _
    // Predicated region
    $region14: #{tpu_custom_call.1} parent=1 // pred_check
      _
    $region15: #{tpu_custom_call.1} parent=1 // pred_check_branch
      %86 = sbr.rel (0) target = $region17
    $region16: #{tpu_custom_call.1} parent=1 // pred_region
      %88 = dma.done [#allocation4], 256
    $region17: #{tpu_custom_call.1} parent=1 // pred_fallthru
      _
    %89 = vsyncpa [#allocation3], 1
    %90 = vsyncpa [#allocation4], 1

</llo_original>
